<compile_context>
chip_gen: v5e
topology: v5e:2x2
jax: 0.10.0
libtpu: 0.0.40
codegen_flags: <defaults>
</compile_context>

<pallas_src>
import math

import jax
import jax.numpy as jnp
from jax import lax
from jax.experimental import pallas as pl
from jax.experimental.pallas import tpu as pltpu

NEG_INF = -1e30  # finite "minus infinity": avoids exp(-inf - -inf) = NaN


def _flash_attn_kernel(qi_tab_ref, ki_tab_ref,   # scalar-prefetch (SMEM)
                       q_ref, k_ref, v_ref,      # (1, 1, tile, Dh) bf16
                       o_ref,                    # (1, 1, tile, Dh) f32
                       m_scr, l_scr, acc_scr):   # VMEM scratch (persist over s)
    """One grid step = (batch n, head h, lower-triangular step s).

    The triangular schedule enumerates, per (n, h), the pairs
    (qi, ki) with ki <= qi in row-major order, so:
      ki == 0  -> first kv tile for this q tile   (init scratch)
      ki <  qi -> fully-past kv tile              (no causal mask needed)
      ki == qi -> diagonal tile == last kv tile   (mask + finalize)
    """
    tile = q_ref.shape[2]
    s_idx = pl.program_id(2)
    qi = qi_tab_ref[s_idx]
    ki = ki_tab_ref[s_idx]

    @pl.when(ki == 0)
    def _init():
        m_scr[...] = jnp.full(m_scr.shape, NEG_INF, jnp.float32)
        l_scr[...] = jnp.zeros(l_scr.shape, jnp.float32)
        acc_scr[...] = jnp.zeros(acc_scr.shape, jnp.float32)

    q = q_ref[0, 0]   # (tile, Dh) bf16, already scaled by 1/sqrt(Dh)
    k = k_ref[0, 0]   # (tile, Dh) bf16
    v = v_ref[0, 0]   # (tile, Dh) bf16

    # scores = q @ k^T (contract Dh); bf16 operands, f32 accumulate on the MXU.
    s_raw = lax.dot_general(q, k, (((1,), (1,)), ((), ())),
                            preferred_element_type=jnp.float32)     # (tile, tile)

    def online_softmax_update(s):
        m_prev = m_scr[...]
        m_new = jnp.maximum(m_prev, jnp.max(s, axis=-1, keepdims=True))
        alpha = jnp.exp(m_prev - m_new)
        p = jnp.exp(s - m_new)                                       # f32
        l_scr[...] = alpha * l_scr[...] + jnp.sum(p, axis=-1, keepdims=True)
        acc_scr[...] = alpha * acc_scr[...] + jnp.dot(
            p.astype(jnp.bfloat16), v, preferred_element_type=jnp.float32)
        m_scr[...] = m_new

    # Fully-past tiles: no iota/where VPU work at all.
    @pl.when(ki < qi)
    def _past_tile():
        online_softmax_update(s_raw)

    # Diagonal tile: apply the causal mask, then finalize (it is the last kv
    # tile for this q tile under the triangular schedule).
    @pl.when(ki == qi)
    def _diag_tile():
        row = lax.broadcasted_iota(jnp.int32, (tile, tile), 0)
        col = lax.broadcasted_iota(jnp.int32, (tile, tile), 1)
        online_softmax_update(jnp.where(col <= row, s_raw, NEG_INF))
        o_ref[0, 0] = (acc_scr[...] *
                       pl.reciprocal(l_scr[...], approx=True)).astype(o_ref.dtype)


def _pick_tile(L, max_tile=256):
    """Largest sublane-legal divisor of L that is <= max_tile.

    Falls back to the full length only if no such divisor exists (rare; e.g.
    prime L > max_tile).
    """
    for d in range(min(max_tile, L), 0, -1):
        if L % d == 0 and (d % 8 == 0 or d == L):
            return d
    return L


def _vmem_limit_bytes():
    """Per-generation scoped-VMEM budget (v5e/v6e: 128 MiB, v7x: 64 MiB)."""
    try:
        cap = pltpu.get_tpu_info().vmem_capacity_bytes
    except Exception:
        cap = 64 * 1024 * 1024          # conservative: v7x per-core VMEM
    return min(int(cap * 3) // 4, 100 * 1024 * 1024)


def mha_forward(x, params, num_heads, *, max_tile=256):
    """x: (L, N, E) f32, PyTorch nn.MultiheadAttention layout (batch_first=False).

    Returns (attn_output, None), matching need_weights=False.
    """
    L, N, E = x.shape
    H = num_heads
    assert E % H == 0, "embed dim must be divisible by num_heads"
    Dh = E // H
    scale = 1.0 / math.sqrt(Dh)

    tile = _pick_tile(L, max_tile)
    assert L % tile == 0
    T = L // tile  # number of q / kv tiles (tq == tkv by construction)

    # ---- in-projection hoisted out of the kernel: one wide bf16 GEMM --------
    # (Weight transpose/cast is tiny and folds under jit; precompute it
    #  separately if calling un-jitted in a tight loop.)
    w_in_t = jnp.transpose(params["in_proj_weight"], (1, 0)).astype(jnp.bfloat16)  # (E, 3E)
    b_in = params["in_proj_bias"].astype(jnp.float32)                               # (3E,)
    x_flat = x.reshape(L * N, E).astype(jnp.bfloat16)
    qkv = jnp.dot(x_flat, w_in_t, preferred_element_type=jnp.float32) + b_in        # (L*N, 3E) f32
    q, k, v = jnp.split(qkv, 3, axis=-1)

    def to_heads(t):  # (L*N, E) -> (N, H, L, Dh)
        return jnp.transpose(t.reshape(L, N, H, Dh), (1, 2, 0, 3))

    qh = (to_heads(q) * scale).astype(jnp.bfloat16)
    kh = to_heads(k).astype(jnp.bfloat16)
    vh = to_heads(v).astype(jnp.bfloat16)

    # ---- lower-triangular (q-tile, kv-tile) schedule via scalar prefetch ----
    qi_list, ki_list = [], []
    for qi in range(T):
        for ki in range(qi + 1):
            qi_list.append(qi)
            ki_list.append(ki)
    qi_tab = jnp.asarray(qi_list, jnp.int32)
    ki_tab = jnp.asarray(ki_list, jnp.int32)
    n_steps = len(qi_list)

    grid = (N, H, n_steps)

    q_spec = pl.BlockSpec((1, 1, tile, Dh), lambda n, h, s, qi_t, ki_t: (n, h, qi_t[s], 0))
    k_spec = pl.BlockSpec((1, 1, tile, Dh), lambda n, h, s, qi_t, ki_t: (n, h, ki_t[s], 0))
    v_spec = pl.BlockSpec((1, 1, tile, Dh), lambda n, h, s, qi_t, ki_t: (n, h, ki_t[s], 0))
    o_spec = pl.BlockSpec((1, 1, tile, Dh), lambda n, h, s, qi_t, ki_t: (n, h, qi_t[s], 0))
    # Note: K/V are the only large per-step-changing DMAs; pipeline_mode=
    # pl.Buffered(3) on k_spec/v_spec is a worthwhile sweep once DMA is exposed.

    ctx = pl.pallas_call(
        _flash_attn_kernel,
        out_shape=jax.ShapeDtypeStruct((N, H, L, Dh), jnp.float32),
        grid_spec=pltpu.PrefetchScalarGridSpec(
            num_scalar_prefetch=2,
            grid=grid,
            in_specs=[q_spec, k_spec, v_spec],
            out_specs=o_spec,
            scratch_shapes=[
                pltpu.VMEM((tile, 1), jnp.float32),   # running max
                pltpu.VMEM((tile, 1), jnp.float32),   # running sum
                pltpu.VMEM((tile, Dh), jnp.float32),  # context accumulator
            ],
        ),
        compiler_params=pltpu.CompilerParams(
            dimension_semantics=("parallel", "parallel", "arbitrary"),
            vmem_limit_bytes=_vmem_limit_bytes(),
        ),
    )(qi_tab, ki_tab, qh, kh, vh)

    # ---- out-projection as one f32 GEMM outside the kernel ------------------
    ctx = jnp.transpose(ctx, (2, 0, 1, 3)).reshape(L, N, E)          # (L, N, E) f32
    out = (jnp.einsum("lne,fe->lnf", ctx, params["out_proj_weight"])
           + params["out_proj_bias"])
    return out, None


def mha_reference(x, params, num_heads):
    """Pure-JAX f32 reference (same math as torch.nn.MultiheadAttention fwd)."""
    L, N, E = x.shape
    Dh = E // num_heads
    qkv = jnp.einsum("lne,fe->lnf", x, params["in_proj_weight"]) + params["in_proj_bias"]
    q, k, v = jnp.split(qkv, 3, axis=-1)

    def split_heads(t):  # (L, N, E) -> (N, H, L, Dh)
        return jnp.transpose(t.reshape(L, N, num_heads, Dh), (1, 2, 0, 3))

    qh, kh, vh = split_heads(q), split_heads(k), split_heads(v)
    s = jnp.einsum("nhqd,nhkd->nhqk", qh, kh) / math.sqrt(Dh)
    mask = jnp.triu(jnp.full((L, L), -jnp.inf), k=1)
    s = s + mask
    p = jax.nn.softmax(s, axis=-1)
    ctx = jnp.einsum("nhqk,nhkd->nhqd", p, vh)          # (N, H, L, Dh)
    ctx = jnp.transpose(ctx, (2, 0, 1, 3)).reshape(L, N, E)
    out = jnp.einsum("lne,fe->lnf", ctx, params["out_proj_weight"]) + params["out_proj_bias"]
    return out


def init_params(key, dim_emb):
    k1, k2, k3, k4 = jax.random.split(key, 4)
    return {
        "in_proj_weight": 0.05 * jax.random.normal(k1, (3 * dim_emb, dim_emb), jnp.float32),
        "in_proj_bias": 0.05 * jax.random.normal(k2, (3 * dim_emb,), jnp.float32),
        "out_proj_weight": 0.05 * jax.random.normal(k3, (dim_emb, dim_emb), jnp.float32),
        "out_proj_bias": 0.05 * jax.random.normal(k4, (dim_emb,), jnp.float32),
    }


if __name__ == "__main__":
    L, N, E, H = 8, 2, 32, 4   # seq, batch, embed dim, heads

    key = jax.random.PRNGKey(0)
    kx, kp = jax.random.split(key)
    x = jax.random.normal(kx, (L, N, E), jnp.float32)   # PyTorch (seq, batch, embed) layout
    params = init_params(kp, E)

    fwd = jax.jit(lambda xx, pp: mha_forward(xx, pp, H))
    y, _ = fwd(x, params)
    y = jax.block_until_ready(y)

    y_ref = mha_reference(x, params, H)
    assert y.shape == (L, N, E)
    # bf16 MXU operands + approx reciprocal => compare at bf16-appropriate tolerance.
    max_err = float(jnp.max(jnp.abs(y - y_ref)))
    assert jnp.allclose(y, y_ref, atol=2e-2, rtol=2e-2), f"mismatch vs reference (max abs err {max_err})"

    print("KERNEL_OK")
</pallas_src>

<mosaic_0001>
module attributes {stable_mosaic.version = 11 : i64} {
  func.func @_flash_attn_kernel(%arg0: i32, %arg1: i32, %arg2: i32, %arg3: memref<1xi32, #tpu.memory_space<smem>>, %arg4: memref<1xi32, #tpu.memory_space<smem>>, %arg5: memref<1x1x8x8xbf16, #tpu.memory_space<vmem>>, %arg6: memref<1x1x8x8xbf16, #tpu.memory_space<vmem>>, %arg7: memref<1x1x8x8xbf16, #tpu.memory_space<vmem>>, %arg8: memref<1x1x8x8xf32, #tpu.memory_space<vmem>>, %arg9: memref<8x1xf32, #tpu.memory_space<vmem>>, %arg10: memref<8x1xf32, #tpu.memory_space<vmem>>, %arg11: memref<8x8xf32, #tpu.memory_space<vmem>>) attributes {dimension_semantics = [#tpu.dimension_semantics<parallel>, #tpu.dimension_semantics<parallel>, #tpu.dimension_semantics<arbitrary>], iteration_bounds = array<i64: 2, 4, 1>, scalar_prefetch = 2 : i64, scratch_operands = 3 : i64, tpu.core_type = #tpu.core_type<tc>, window_params = [{transform_indices = @transform_0, window_bounds = array<i64: 1, 1, 8, 8>}, {transform_indices = @transform_1, window_bounds = array<i64: 1, 1, 8, 8>}, {transform_indices = @transform_2, window_bounds = array<i64: 1, 1, 8, 8>}, {transform_indices = @transform_3, window_bounds = array<i64: 1, 1, 8, 8>}]} {
    %0 = arith.index_cast %arg2 : i32 to index
    %1 = memref.load %arg3[%0] : memref<1xi32, #tpu.memory_space<smem>>
    %2 = arith.index_cast %arg2 : i32 to index
    %3 = memref.load %arg4[%2] : memref<1xi32, #tpu.memory_space<smem>>
    %c0_i32 = arith.constant 0 : i32
    %4 = arith.cmpi eq, %3, %c0_i32 : i32
    %5 = arith.extui %4 : i1 to i32
    %c0_i32_0 = arith.constant 0 : i32
    %6 = arith.cmpi ne, %5, %c0_i32_0 : i32
    scf.if %6 {
      %cst_14 = arith.constant -1.000000e+30 : f32
      %20 = vector.broadcast %cst_14 : f32 to vector<8x1xf32>
      %c0_15 = arith.constant 0 : index
      %c0_16 = arith.constant 0 : index
      %21 = vector.load %arg9[%c0_15, %c0_16] : memref<8x1xf32, #tpu.memory_space<vmem>>, vector<8x1xf32>
      tpu.vector_store %arg9[%c0_15, %c0_16], %20 {strides = array<i32>} : memref<8x1xf32, #tpu.memory_space<vmem>>, vector<8x1xf32>,
      %cst_17 = arith.constant 0.000000e+00 : f32
      %22 = vector.broadcast %cst_17 : f32 to vector<8x1xf32>
      %c0_18 = arith.constant 0 : index
      %c0_19 = arith.constant 0 : index
      %23 = vector.load %arg10[%c0_18, %c0_19] : memref<8x1xf32, #tpu.memory_space<vmem>>, vector<8x1xf32>
      tpu.vector_store %arg10[%c0_18, %c0_19], %22 {strides = array<i32>} : memref<8x1xf32, #tpu.memory_space<vmem>>, vector<8x1xf32>,
      %cst_20 = arith.constant 0.000000e+00 : f32
      %24 = vector.broadcast %cst_20 : f32 to vector<8x8xf32>
      %c0_21 = arith.constant 0 : index
      %c0_22 = arith.constant 0 : index
      %25 = vector.load %arg11[%c0_21, %c0_22] : memref<8x8xf32, #tpu.memory_space<vmem>>, vector<8x8xf32>
      tpu.vector_store %arg11[%c0_21, %c0_22], %24 {strides = array<i32>} : memref<8x8xf32, #tpu.memory_space<vmem>>, vector<8x8xf32>,
    } else {
    }
    %c0 = arith.constant 0 : index
    %c0_1 = arith.constant 0 : index
    %c0_2 = arith.constant 0 : index
    %c0_3 = arith.constant 0 : index
    %7 = vector.load %arg5[%c0, %c0_1, %c0_2, %c0_3] : memref<1x1x8x8xbf16, #tpu.memory_space<vmem>>, vector<1x1x8x8xbf16>
    %8 = vector.shape_cast %7 : vector<1x1x8x8xbf16> to vector<8x8xbf16>
    %c0_4 = arith.constant 0 : index
    %c0_5 = arith.constant 0 : index
    %c0_6 = arith.constant 0 : index
    %c0_7 = arith.constant 0 : index
    %9 = vector.load %arg6[%c0_4, %c0_5, %c0_6, %c0_7] : memref<1x1x8x8xbf16, #tpu.memory_space<vmem>>, vector<1x1x8x8xbf16>
    %10 = vector.shape_cast %9 : vector<1x1x8x8xbf16> to vector<8x8xbf16>
    %c0_8 = arith.constant 0 : index
    %c0_9 = arith.constant 0 : index
    %c0_10 = arith.constant 0 : index
    %c0_11 = arith.constant 0 : index
    %11 = vector.load %arg7[%c0_8, %c0_9, %c0_10, %c0_11] : memref<1x1x8x8xbf16, #tpu.memory_space<vmem>>, vector<1x1x8x8xbf16>
    %12 = vector.shape_cast %11 : vector<1x1x8x8xbf16> to vector<8x8xbf16>
    %cst = arith.constant dense<0.000000e+00> : vector<8x8xf32>
    %13 = tpu.matmul %8, %10, %cst {dimension_numbers = #tpu.dot_dimension_numbers<[1], [1], [0], [0], [0, 0, 1, 0], [], []>} : vector<8x8xbf16>, vector<8x8xbf16>, vector<8x8xf32> -> vector<8x8xf32>
    %14 = arith.cmpi slt, %3, %1 : i32
    %15 = arith.extui %14 : i1 to i32
    %c0_i32_12 = arith.constant 0 : i32
    %16 = arith.cmpi ne, %15, %c0_i32_12 : i32
    scf.if %16 {
      %c0_14 = arith.constant 0 : index
      %c0_15 = arith.constant 0 : index
      %20 = vector.load %arg9[%c0_14, %c0_15] : memref<8x1xf32, #tpu.memory_space<vmem>>, vector<8x1xf32>
      %cst_16 = arith.constant dense<0xFF800000> : vector<8xf32>
      %21 = vector.multi_reduction <maximumf>, %13, %cst_16 [1] : vector<8x8xf32> to vector<8xf32>
      %22 = vector.shape_cast %21 : vector<8xf32> to vector<8x1xf32>
      %23 = arith.maximumf %20, %22 : vector<8x1xf32>
      %24 = arith.subf %20, %23 : vector<8x1xf32>
      %25 = math.exp %24 : vector<8x1xf32>
      %26 = vector.broadcast %23 : vector<8x1xf32> to vector<8x8xf32>
      %27 = arith.subf %13, %26 : vector<8x8xf32>
      %28 = math.exp %27 : vector<8x8xf32>
      %c0_17 = arith.constant 0 : index
      %c0_18 = arith.constant 0 : index
      %29 = vector.load %arg10[%c0_17, %c0_18] : memref<8x1xf32, #tpu.memory_space<vmem>>, vector<8x1xf32>
      %30 = arith.mulf %25, %29 : vector<8x1xf32>
      %cst_19 = arith.constant dense<0.000000e+00> : vector<8xf32>
      %31 = vector.multi_reduction <add>, %28, %cst_19 [1] : vector<8x8xf32> to vector<8xf32>
      %32 = vector.shape_cast %31 : vector<8xf32> to vector<8x1xf32>
      %33 = arith.addf %30, %32 : vector<8x1xf32>
      %c0_20 = arith.constant 0 : index
      %c0_21 = arith.constant 0 : index
      %34 = vector.load %arg10[%c0_20, %c0_21] : memref<8x1xf32, #tpu.memory_space<vmem>>, vector<8x1xf32>
      tpu.vector_store %arg10[%c0_20, %c0_21], %33 {strides = array<i32>} : memref<8x1xf32, #tpu.memory_space<vmem>>, vector<8x1xf32>,
      %c0_22 = arith.constant 0 : index
      %c0_23 = arith.constant 0 : index
      %35 = vector.load %arg11[%c0_22, %c0_23] : memref<8x8xf32, #tpu.memory_space<vmem>>, vector<8x8xf32>
      %36 = vector.broadcast %25 : vector<8x1xf32> to vector<8x8xf32>
      %37 = arith.mulf %36, %35 : vector<8x8xf32>
      %38 = arith.truncf %28 : vector<8x8xf32> to vector<8x8xbf16>
      %cst_24 = arith.constant dense<0.000000e+00> : vector<8x8xf32>
      %39 = tpu.matmul %38, %12, %cst_24 {dimension_numbers = #tpu.dot_dimension_numbers<[1], [0], [0], [1], [0, 0, 1, 1], [], []>} : vector<8x8xbf16>, vector<8x8xbf16>, vector<8x8xf32> -> vector<8x8xf32>
      %40 = arith.addf %37, %39 : vector<8x8xf32>
      %c0_25 = arith.constant 0 : index
      %c0_26 = arith.constant 0 : index
      %41 = vector.load %arg11[%c0_25, %c0_26] : memref<8x8xf32, #tpu.memory_space<vmem>>, vector<8x8xf32>
      tpu.vector_store %arg11[%c0_25, %c0_26], %40 {strides = array<i32>} : memref<8x8xf32, #tpu.memory_space<vmem>>, vector<8x8xf32>,
      %c0_27 = arith.constant 0 : index
      %c0_28 = arith.constant 0 : index
      %42 = vector.load %arg9[%c0_27, %c0_28] : memref<8x1xf32, #tpu.memory_space<vmem>>, vector<8x1xf32>
      tpu.vector_store %arg9[%c0_27, %c0_28], %23 {strides = array<i32>} : memref<8x1xf32, #tpu.memory_space<vmem>>, vector<8x1xf32>,
    } else {
    }
    %17 = arith.cmpi eq, %3, %1 : i32
    %18 = arith.extui %17 : i1 to i32
    %c0_i32_13 = arith.constant 0 : i32
    %19 = arith.cmpi ne, %18, %c0_i32_13 : i32
    scf.if %19 {
      %20 = tpu.iota {dimensions = array<i32: 0>} : vector<8x8xi32>
      %21 = tpu.iota {dimensions = array<i32: 1>} : vector<8x8xi32>
      %22 = arith.cmpi sle, %21, %20 : vector<8x8xi32>
      %cst_14 = arith.constant -1.000000e+30 : f32
      %23 = vector.broadcast %cst_14 : f32 to vector<8x8xf32>
      %24 = arith.select %22, %13, %23 : vector<8x8xi1>, vector<8x8xf32>
      %c0_15 = arith.constant 0 : index
      %c0_16 = arith.constant 0 : index
      %25 = vector.load %arg9[%c0_15, %c0_16] : memref<8x1xf32, #tpu.memory_space<vmem>>, vector<8x1xf32>
      %cst_17 = arith.constant dense<0xFF800000> : vector<8xf32>
      %26 = vector.multi_reduction <maximumf>, %24, %cst_17 [1] : vector<8x8xf32> to vector<8xf32>
      %27 = vector.shape_cast %26 : vector<8xf32> to vector<8x1xf32>
      %28 = arith.maximumf %25, %27 : vector<8x1xf32>
      %29 = arith.subf %25, %28 : vector<8x1xf32>
      %30 = math.exp %29 : vector<8x1xf32>
      %31 = vector.broadcast %28 : vector<8x1xf32> to vector<8x8xf32>
      %32 = arith.subf %24, %31 : vector<8x8xf32>
      %33 = math.exp %32 : vector<8x8xf32>
      %c0_18 = arith.constant 0 : index
      %c0_19 = arith.constant 0 : index
      %34 = vector.load %arg10[%c0_18, %c0_19] : memref<8x1xf32, #tpu.memory_space<vmem>>, vector<8x1xf32>
      %35 = arith.mulf %30, %34 : vector<8x1xf32>
      %cst_20 = arith.constant dense<0.000000e+00> : vector<8xf32>
      %36 = vector.multi_reduction <add>, %33, %cst_20 [1] : vector<8x8xf32> to vector<8xf32>
      %37 = vector.shape_cast %36 : vector<8xf32> to vector<8x1xf32>
      %38 = arith.addf %35, %37 : vector<8x1xf32>
      %c0_21 = arith.constant 0 : index
      %c0_22 = arith.constant 0 : index
      %39 = vector.load %arg10[%c0_21, %c0_22] : memref<8x1xf32, #tpu.memory_space<vmem>>, vector<8x1xf32>
      tpu.vector_store %arg10[%c0_21, %c0_22], %38 {strides = array<i32>} : memref<8x1xf32, #tpu.memory_space<vmem>>, vector<8x1xf32>,
      %c0_23 = arith.constant 0 : index
      %c0_24 = arith.constant 0 : index
      %40 = vector.load %arg11[%c0_23, %c0_24] : memref<8x8xf32, #tpu.memory_space<vmem>>, vector<8x8xf32>
      %41 = vector.broadcast %30 : vector<8x1xf32> to vector<8x8xf32>
      %42 = arith.mulf %41, %40 : vector<8x8xf32>
      %43 = arith.truncf %33 : vector<8x8xf32> to vector<8x8xbf16>
      %cst_25 = arith.constant dense<0.000000e+00> : vector<8x8xf32>
      %44 = tpu.matmul %43, %12, %cst_25 {dimension_numbers = #tpu.dot_dimension_numbers<[1], [0], [0], [1], [0, 0, 1, 1], [], []>} : vector<8x8xbf16>, vector<8x8xbf16>, vector<8x8xf32> -> vector<8x8xf32>
      %45 = arith.addf %42, %44 : vector<8x8xf32>
      %c0_26 = arith.constant 0 : index
      %c0_27 = arith.constant 0 : index
      %46 = vector.load %arg11[%c0_26, %c0_27] : memref<8x8xf32, #tpu.memory_space<vmem>>, vector<8x8xf32>
      tpu.vector_store %arg11[%c0_26, %c0_27], %45 {strides = array<i32>} : memref<8x8xf32, #tpu.memory_space<vmem>>, vector<8x8xf32>,
      %c0_28 = arith.constant 0 : index
      %c0_29 = arith.constant 0 : index
      %47 = vector.load %arg9[%c0_28, %c0_29] : memref<8x1xf32, #tpu.memory_space<vmem>>, vector<8x1xf32>
      tpu.vector_store %arg9[%c0_28, %c0_29], %28 {strides = array<i32>} : memref<8x1xf32, #tpu.memory_space<vmem>>, vector<8x1xf32>,
      %c0_30 = arith.constant 0 : index
      %c0_31 = arith.constant 0 : index
      %48 = vector.load %arg11[%c0_30, %c0_31] : memref<8x8xf32, #tpu.memory_space<vmem>>, vector<8x8xf32>
      %c0_32 = arith.constant 0 : index
      %c0_33 = arith.constant 0 : index
      %49 = vector.load %arg10[%c0_32, %c0_33] : memref<8x1xf32, #tpu.memory_space<vmem>>, vector<8x1xf32>
      %50 = tpu.reciprocal %49 {approx = true} : vector<8x1xf32> -> vector<8x1xf32>
      %51 = vector.broadcast %50 : vector<8x1xf32> to vector<8x8xf32>
      %52 = arith.mulf %48, %51 : vector<8x8xf32>
      %c0_34 = arith.constant 0 : index
      %c0_35 = arith.constant 0 : index
      %c0_36 = arith.constant 0 : index
      %c0_37 = arith.constant 0 : index
      %53 = vector.load %arg8[%c0_34, %c0_35, %c0_36, %c0_37] : memref<1x1x8x8xf32, #tpu.memory_space<vmem>>, vector<1x1x8x8xf32>
      %54 = vector.shape_cast %53 : vector<1x1x8x8xf32> to vector<8x8xf32>
      %55 = vector.shape_cast %52 : vector<8x8xf32> to vector<1x1x8x8xf32>
      tpu.vector_store %arg8[%c0_34, %c0_35, %c0_36, %c0_37], %55 {strides = array<i32>} : memref<1x1x8x8xf32, #tpu.memory_space<vmem>>, vector<1x1x8x8xf32>,
    } else {
    }
    return
  }
  func.func @transform_0(%arg0: i32, %arg1: i32, %arg2: i32, %arg3: memref<1xi32, #tpu.memory_space<smem>>, %arg4: memref<1xi32, #tpu.memory_space<smem>>) -> (i32, i32, i32, i32) {
    %0 = arith.index_cast %arg2 : i32 to index
    %1 = memref.load %arg3[%0] : memref<1xi32, #tpu.memory_space<smem>>
    %c0_i32 = arith.constant 0 : i32
    %c0_i32_0 = arith.constant 0 : i32
    return %arg0, %arg1, %1, %c0_i32 : i32, i32, i32, i32
  }
  func.func @transform_1(%arg0: i32, %arg1: i32, %arg2: i32, %arg3: memref<1xi32, #tpu.memory_space<smem>>, %arg4: memref<1xi32, #tpu.memory_space<smem>>) -> (i32, i32, i32, i32) {
    %0 = arith.index_cast %arg2 : i32 to index
    %1 = memref.load %arg4[%0] : memref<1xi32, #tpu.memory_space<smem>>
    %c0_i32 = arith.constant 0 : i32
    %c0_i32_0 = arith.constant 0 : i32
    return %arg0, %arg1, %1, %c0_i32 : i32, i32, i32, i32
  }
  func.func @transform_2(%arg0: i32, %arg1: i32, %arg2: i32, %arg3: memref<1xi32, #tpu.memory_space<smem>>, %arg4: memref<1xi32, #tpu.memory_space<smem>>) -> (i32, i32, i32, i32) {
    %0 = arith.index_cast %arg2 : i32 to index
    %1 = memref.load %arg4[%0] : memref<1xi32, #tpu.memory_space<smem>>
    %c0_i32 = arith.constant 0 : i32
    %c0_i32_0 = arith.constant 0 : i32
    return %arg0, %arg1, %1, %c0_i32 : i32, i32, i32, i32
  }
  func.func @transform_3(%arg0: i32, %arg1: i32, %arg2: i32, %arg3: memref<1xi32, #tpu.memory_space<smem>>, %arg4: memref<1xi32, #tpu.memory_space<smem>>) -> (i32, i32, i32, i32) {
    %0 = arith.index_cast %arg2 : i32 to index
    %1 = memref.load %arg3[%0] : memref<1xi32, #tpu.memory_space<smem>>
    %c0_i32 = arith.constant 0 : i32
    %c0_i32_0 = arith.constant 0 : i32
    return %arg0, %arg1, %1, %c0_i32 : i32, i32, i32, i32
  }
}

</mosaic_0001>

<llo_original>
// kernel: _lambda_.1
$region0: #{_lambda_.1}
  #allocation0 [shape = 'u32[]', space=smem, size = 0x4, offset = 0x4, fixed_abs, tag = 'smem constant byte address 0x4 - core index']
  #allocation1 [shape = 'u32[72,128]{1,0:T(1,128)}', space=vmem, size = 0x9000, scoped, tag = 'internal scratch']
  #allocation2 [shape = 'f32[8,1]{1,0:T(8,128)}', space=vmem, size = 0x1000, scoped, tag = 'scratch operand']
  #allocation3 [shape = 'f32[8,1]{1,0:T(8,128)}', space=vmem, size = 0x1000, scoped, tag = 'scratch operand']
  #allocation4 [shape = 'f32[8,8]{1,0:T(8,128)}', space=vmem, size = 0x1000, scoped, tag = 'scratch operand']
  #allocation5 [shape = 's32[1]{0}', space=sflag, size = 0x4, scoped, tag = 'scoped memory for _lambda_.1']
  #allocation6 [shape = 's32[1]{0:T(128)S(6)}', space=smem, size = 0x200, scoped, tag = 'prefetched SMEM operand 0']
  #allocation7 [shape = 's32[1]{0:T(128)S(6)}', space=smem, size = 0x200, scoped, tag = 'prefetched SMEM operand 1']
  %s0 = inlined_call_operand.<no memory space> [shape: s32[1], index: 0, kind: input, shape index: {}, may-alias: {0,1}]
  %s1 = inlined_call_operand.<no memory space> [shape: s32[1], index: 1, kind: input, shape index: {}, may-alias: {0,1}]
  %s2 = inlined_call_operand.vmem [shape: bf16[2,4,8,8], index: 2, kind: input, shape index: {}]
  %s3 = inlined_call_operand.vmem [shape: bf16[2,4,8,8], index: 3, kind: input, shape index: {}]
  %s4 = inlined_call_operand.vmem [shape: bf16[2,4,8,8], index: 4, kind: input, shape index: {}]
  %s5 = inlined_call_operand.vmem [shape: f32[2,4,8,8], index: 5, kind: output, shape index: {}]
  %s6 = sld [smem:[#allocation0]]
  $region57: #{_lambda_.1} parent=0
    _
  %s8 = ssub.s32 1, %s6
  %s9 = scalar_select 0, %s8, %s6
  %10 = sst [smem:[#allocation6]] %s0
  %11 = sst [smem:[#allocation7]] %s1
  loop: start=0, step=1, limit=10
  $region2: #{_lambda_.1} parent=0 // loop_pre_header
    _
  $region3: #{_lambda_.1} parent=0 // loop_header
    %s13 = sphi 0, %s17
    %p14 = scmp.ge.s32.totalorder %s13, 10
    %s20 = sphi 0, %s39
    %s21 = sphi 0, %s35
    %s22 = sphi 0, %s31
    %s23 = sphi 0, %s20
    %s24 = sphi 0, %s21
    %s25 = sphi 0, %s22
    %s26 = sphi 0, %s23
    %s27 = sphi 0, %s24
    %s28 = sphi 0, %s25
    %s48 = sphi 0, %s50
    %s51 = sphi 0, %s48
    %s52 = sphi 0, %s51
    %s68 = sphi 0, %s52
    %s80 = sphi 0, %s82
    %s83 = sphi 0, %s80
    %s84 = sphi 0, %s83
    %s100 = sphi 0, %s84
    %s112 = sphi 0, %s114
    %s115 = sphi 0, %s112
    %s116 = sphi 0, %s115
    %s132 = sphi 0, %s116
    %s144 = sphi 0, %s146
    %s147 = sphi 0, %s144
    %s148 = sphi 0, %s147
    %s164 = sphi 0, %s148
  $region4: #{_lambda_.1} parent=0 // loop_header_branch
    %16 = sbr.rel (%p14) target = $region8
  $region5: #{_lambda_.1} parent=0 // loop_body
    %s18 = ssub.s32 %s13, 1
    %s19 = ssub.s32 %s13, 2
    %s29 = sadd.s32 1, %s22
    %p30 = scmp.ge.s32.totalorder %s29, 1
    %s31 = scalar_select %p30, 0, %s29
    %s32 = sadd.s32 1, %s21
    %s33 = scalar_select %p30, %s32, %s21
    %p34 = scmp.ge.s32.totalorder %s33, 4
    %s35 = scalar_select %p34, 0, %s33
    %s36 = sadd.s32 1, %s20
    %s37 = scalar_select %p34, %s36, %s20
    %p38 = scmp.ge.s32.totalorder %s37, 2
    %s39 = scalar_select %p38, 0, %s37
    %s40 = sld [smem:[#allocation6 + %s22]]
    %s41 = sld [smem:[#allocation6 + %s31]]
    %s42 = ssub.s32 %s20, %s39
    %s43 = ssub.s32 %s21, %s35
    %s44 = sor.u32 %s42, %s43
    %s45 = ssub.s32 %s40, %s41
    %s46 = sor.u32 %s44, %s45
    %p47 = scmp.eq.s32.totalorder %s46, 0
    %s49 = sadd.s32 %s48, 1
    %s50 = scalar_select %p47, %s48, %s49
    %p53 = pneg %p47
    %p54 = scmp.eq.s32.totalorder %s13, 7
    %p55 = por %p53, %p54
    %p56 = scmp.ne.s32.totalorder %s48, %s51
    %p57 = scmp.eq.s32.totalorder %s13, 0
    %p58 = por %p56, %p57
    %p59 = scmp.ne.s32.totalorder %s48, %s51
    %p60 = scmp.eq.s32.totalorder %s18, 7
    %p61 = por %p59, %p60
    %p62 = scmp.ne.s32.totalorder %s51, %s52
    %p63 = scmp.eq.s32.totalorder %s18, 0
    %p64 = por %p62, %p63
    %p65 = scmp.ne.s32.totalorder %s51, %s52
    %p66 = scmp.eq.s32.totalorder %s19, 7
    %p67 = por %p65, %p66
    %p69 = scmp.ne.s32.totalorder %s52, %s68
    %p70 = scmp.eq.s32.totalorder %s19, 0
    %p71 = por %p69, %p70
    %s72 = sld [smem:[#allocation7 + %s22]]
    %s73 = sld [smem:[#allocation7 + %s31]]
    %s74 = ssub.s32 %s20, %s39
    %s75 = ssub.s32 %s21, %s35
    %s76 = sor.u32 %s74, %s75
    %s77 = ssub.s32 %s72, %s73
    %s78 = sor.u32 %s76, %s77
    %p79 = scmp.eq.s32.totalorder %s78, 0
    %s81 = sadd.s32 %s80, 1
    %s82 = scalar_select %p79, %s80, %s81
    %p85 = pneg %p79
    %p86 = scmp.eq.s32.totalorder %s13, 7
    %p87 = por %p85, %p86
    %p88 = scmp.ne.s32.totalorder %s80, %s83
    %p89 = scmp.eq.s32.totalorder %s13, 0
    %p90 = por %p88, %p89
    %p91 = scmp.ne.s32.totalorder %s80, %s83
    %p92 = scmp.eq.s32.totalorder %s18, 7
    %p93 = por %p91, %p92
    %p94 = scmp.ne.s32.totalorder %s83, %s84
    %p95 = scmp.eq.s32.totalorder %s18, 0
    %p96 = por %p94, %p95
    %p97 = scmp.ne.s32.totalorder %s83, %s84
    %p98 = scmp.eq.s32.totalorder %s19, 7
    %p99 = por %p97, %p98
    %p101 = scmp.ne.s32.totalorder %s84, %s100
    %p102 = scmp.eq.s32.totalorder %s19, 0
    %p103 = por %p101, %p102
    %s104 = sld [smem:[#allocation7 + %s22]]
    %s105 = sld [smem:[#allocation7 + %s31]]
    %s106 = ssub.s32 %s20, %s39
    %s107 = ssub.s32 %s21, %s35
    %s108 = sor.u32 %s106, %s107
    %s109 = ssub.s32 %s104, %s105
    %s110 = sor.u32 %s108, %s109
    %p111 = scmp.eq.s32.totalorder %s110, 0
    %s113 = sadd.s32 %s112, 1
    %s114 = scalar_select %p111, %s112, %s113
    %p117 = pneg %p111
    %p118 = scmp.eq.s32.totalorder %s13, 7
    %p119 = por %p117, %p118
    %p120 = scmp.ne.s32.totalorder %s112, %s115
    %p121 = scmp.eq.s32.totalorder %s13, 0
    %p122 = por %p120, %p121
    %p123 = scmp.ne.s32.totalorder %s112, %s115
    %p124 = scmp.eq.s32.totalorder %s18, 7
    %p125 = por %p123, %p124
    %p126 = scmp.ne.s32.totalorder %s115, %s116
    %p127 = scmp.eq.s32.totalorder %s18, 0
    %p128 = por %p126, %p127
    %p129 = scmp.ne.s32.totalorder %s115, %s116
    %p130 = scmp.eq.s32.totalorder %s19, 7
    %p131 = por %p129, %p130
    %p133 = scmp.ne.s32.totalorder %s116, %s132
    %p134 = scmp.eq.s32.totalorder %s19, 0
    %p135 = por %p133, %p134
    %s136 = sld [smem:[#allocation6 + %s22]]
    %s137 = sld [smem:[#allocation6 + %s31]]
    %s138 = ssub.s32 %s20, %s39
    %s139 = ssub.s32 %s21, %s35
    %s140 = sor.u32 %s138, %s139
    %s141 = ssub.s32 %s136, %s137
    %s142 = sor.u32 %s140, %s141
    %p143 = scmp.eq.s32.totalorder %s142, 0
    %s145 = sadd.s32 %s144, 1
    %s146 = scalar_select %p143, %s144, %s145
    %p149 = pneg %p143
    %p150 = scmp.eq.s32.totalorder %s13, 7
    %p151 = por %p149, %p150
    %p152 = scmp.ne.s32.totalorder %s144, %s147
    %p153 = scmp.eq.s32.totalorder %s13, 0
    %p154 = por %p152, %p153
    %p155 = scmp.ne.s32.totalorder %s144, %s147
    %p156 = scmp.eq.s32.totalorder %s18, 7
    %p157 = por %p155, %p156
    %p158 = scmp.ne.s32.totalorder %s147, %s148
    %p159 = scmp.eq.s32.totalorder %s18, 0
    %p160 = por %p158, %p159
    %p161 = scmp.ne.s32.totalorder %s147, %s148
    %p162 = scmp.eq.s32.totalorder %s19, 7
    %p163 = por %p161, %p162
    %p165 = scmp.ne.s32.totalorder %s148, %s164
    %p166 = scmp.eq.s32.totalorder %s19, 0
    %p167 = por %p165, %p166
    %p168 = scmp.le.s32.totalorder 1, %s13
    %p169 = scmp.lt.s32.totalorder %s13, 9
    %p170 = pnand %p168, %p169
    %p171 = pneg %p170
    // Predicated region
    $region9: #{_lambda_.1} parent=5 // pred_check
      _
    $region10: #{_lambda_.1} parent=5 // pred_check_branch
      %173 = sbr.rel (%p170) target = $region12
    $region11: #{_lambda_.1} parent=5 // pred_region
      %s174 = ssub.s32 %s13, 1
    $region12: #{_lambda_.1} parent=5 // pred_fallthru
      _
    %p175 = scmp.lt.s32.totalorder %s13, 8
    // Predicated region
    $region13: #{_lambda_.1} parent=5 // pred_check
      %p176 = pneg %p175
    $region14: #{_lambda_.1} parent=5 // pred_check_branch
      %178 = sbr.rel (%p176) target = $region16
    $region15: #{_lambda_.1} parent=5 // pred_region
      // Predicated region
      $region17: #{_lambda_.1} parent=15 // pred_check
        %p179 = pneg %p58
      $region18: #{_lambda_.1} parent=15 // pred_check_branch
        %181 = sbr.rel (%p179) target = $region20
      $region19: #{_lambda_.1} parent=15 // pred_region
        %s182 = sld [smem:[#allocation6 + %s22]]
        %p183 = scmp.lt.s32.totalorder %s20, 1
        %s184 = scalar_select %p183, %s20, 1
        %p185 = scmp.lt.s32.totalorder %s21, 3
        %s186 = scalar_select %p185, %s21, 3
        %p187 = scmp.lt.s32.totalorder %s182, 0
        %s188 = scalar_select %p187, %s182, 0
        %s189 = sadd.s32 %s188, %s186
        %s190 = smul.addr %s184, 4
        %s191 = sadd.s32 %s189, %s190
        %s192 = smul.addr %s191, 4
        %s193 = scalar_lea.vmem %s2, %s192
        %s194 = sld [smem:[#allocation6 + %s22]]
      $region20: #{_lambda_.1} parent=15 // pred_fallthru
        _
      // Predicated region
      $region21: #{_lambda_.1} parent=15 // pred_check
        %p195 = pneg %p90
      $region22: #{_lambda_.1} parent=15 // pred_check_branch
        %197 = sbr.rel (%p195) target = $region24
      $region23: #{_lambda_.1} parent=15 // pred_region
        %s198 = sld [smem:[#allocation7 + %s22]]
        %p199 = scmp.lt.s32.totalorder %s20, 1
        %s200 = scalar_select %p199, %s20, 1
        %p201 = scmp.lt.s32.totalorder %s21, 3
        %s202 = scalar_select %p201, %s21, 3
        %p203 = scmp.lt.s32.totalorder %s198, 0
        %s204 = scalar_select %p203, %s198, 0
        %s205 = sadd.s32 %s204, %s202
        %s206 = smul.addr %s200, 4
        %s207 = sadd.s32 %s205, %s206
        %s208 = smul.addr %s207, 4
        %s209 = scalar_lea.vmem %s3, %s208
        %s210 = sld [smem:[#allocation7 + %s22]]
      $region24: #{_lambda_.1} parent=15 // pred_fallthru
        _
      // Predicated region
      $region25: #{_lambda_.1} parent=15 // pred_check
        %p211 = pneg %p122
      $region26: #{_lambda_.1} parent=15 // pred_check_branch
        %213 = sbr.rel (%p211) target = $region28
      $region27: #{_lambda_.1} parent=15 // pred_region
        %s214 = sld [smem:[#allocation7 + %s22]]
        %p215 = scmp.lt.s32.totalorder %s20, 1
        %s216 = scalar_select %p215, %s20, 1
        %p217 = scmp.lt.s32.totalorder %s21, 3
        %s218 = scalar_select %p217, %s21, 3
        %p219 = scmp.lt.s32.totalorder %s214, 0
        %s220 = scalar_select %p219, %s214, 0
        %s221 = sadd.s32 %s220, %s218
        %s222 = smul.addr %s216, 4
        %s223 = sadd.s32 %s221, %s222
        %s224 = smul.addr %s223, 4
        %s225 = scalar_lea.vmem %s4, %s224
        %s226 = sld [smem:[#allocation7 + %s22]]
      $region28: #{_lambda_.1} parent=15 // pred_fallthru
        _
    $region16: #{_lambda_.1} parent=5 // pred_fallthru
      _
    %p227 = scmp.le.s32.totalorder 1, %s13
    %p228 = scmp.lt.s32.totalorder %s13, 9
    %p229 = pnand %p227, %p228
    %p230 = pneg %p229
    // Predicated region
    $region29: #{_lambda_.1} parent=5 // pred_check
      _
    $region30: #{_lambda_.1} parent=5 // pred_check_branch
      %232 = sbr.rel (%p229) target = $region32
    $region31: #{_lambda_.1} parent=5 // pred_region
      %s233 = ssub.s32 %s13, 1
      %s234 = sld [smem:[#allocation6 + %s25]]
      %p235 = scmp.lt.s32.totalorder %s23, 1
      %s236 = scalar_select %p235, %s23, 1
      %p237 = scmp.lt.s32.totalorder %s24, 3
      %s238 = scalar_select %p237, %s24, 3
      %p239 = scmp.lt.s32.totalorder %s234, 0
      %s240 = scalar_select %p239, %s234, 0
      %s241 = sadd.s32 %s240, %s238
      %s242 = smul.addr %s236, 4
      %s243 = sadd.s32 %s241, %s242
      %s244 = smul.addr %s243, 4
      %s245 = scalar_lea.vmem %s2, %s244
      %p246 = pneg %p64
      %p247 = pneg %p61
      %s248 = sld [smem:[#allocation7 + %s25]]
      %p249 = scmp.lt.s32.totalorder %s23, 1
      %s250 = scalar_select %p249, %s23, 1
      %p251 = scmp.lt.s32.totalorder %s24, 3
      %s252 = scalar_select %p251, %s24, 3
      %p253 = scmp.lt.s32.totalorder %s248, 0
      %s254 = scalar_select %p253, %s248, 0
      %s255 = sadd.s32 %s254, %s252
      %s256 = smul.addr %s250, 4
      %s257 = sadd.s32 %s255, %s256
      %s258 = smul.addr %s257, 4
      %s259 = scalar_lea.vmem %s3, %s258
      %p260 = pneg %p96
      %p261 = pneg %p93
      %s262 = sld [smem:[#allocation7 + %s25]]
      %p263 = scmp.lt.s32.totalorder %s23, 1
      %s264 = scalar_select %p263, %s23, 1
      %p265 = scmp.lt.s32.totalorder %s24, 3
      %s266 = scalar_select %p265, %s24, 3
      %p267 = scmp.lt.s32.totalorder %s262, 0
      %s268 = scalar_select %p267, %s262, 0
      %s269 = sadd.s32 %s268, %s266
      %s270 = smul.addr %s264, 4
      %s271 = sadd.s32 %s269, %s270
      %s272 = smul.addr %s271, 4
      %s273 = scalar_lea.vmem %s4, %s272
      %p274 = pneg %p128
      %p275 = pneg %p125
      %p276 = pneg %p160
      %p277 = pneg %p157
      %s278 = sld [smem:[#allocation6 + %s25]]
      %p279 = scmp.lt.s32.totalorder %s23, 1
      %s280 = scalar_select %p279, %s23, 1
      %p281 = scmp.lt.s32.totalorder %s24, 3
      %s282 = scalar_select %p281, %s24, 3
      %p283 = scmp.lt.s32.totalorder %s278, 0
      %s284 = scalar_select %p283, %s278, 0
      %s285 = sadd.s32 %s284, %s282
      %s286 = smul.addr %s280, 4
      %s287 = sadd.s32 %s285, %s286
      %s288 = smul.addr %s287, 8
      %s289 = scalar_lea.vmem %s5, %s288
      %s290 = sld [smem:[#allocation6 + %s25]]
      %p291 = scmp.lt.s32.totalorder %s23, 1
      %s292 = scalar_select %p291, %s23, 1
      %p293 = scmp.lt.s32.totalorder %s24, 3
      %s294 = scalar_select %p293, %s24, 3
      %p295 = scmp.lt.s32.totalorder %s290, 0
      %s296 = scalar_select %p295, %s290, 0
      %s297 = sadd.s32 %s296, %s294
      %s298 = smul.addr %s292, 4
      %s299 = sadd.s32 %s297, %s298
      %s300 = smul.addr %s299, 4
      %s301 = scalar_lea.vmem %s2, %s300
      %s302 = sld [smem:[#allocation6 + %s25]]
      %s303 = sld [smem:[#allocation7 + %s25]]
      %p304 = scmp.lt.s32.totalorder %s23, 1
      %s305 = scalar_select %p304, %s23, 1
      %p306 = scmp.lt.s32.totalorder %s24, 3
      %s307 = scalar_select %p306, %s24, 3
      %p308 = scmp.lt.s32.totalorder %s303, 0
      %s309 = scalar_select %p308, %s303, 0
      %s310 = sadd.s32 %s309, %s307
      %s311 = smul.addr %s305, 4
      %s312 = sadd.s32 %s310, %s311
      %s313 = smul.addr %s312, 4
      %s314 = scalar_lea.vmem %s3, %s313
      %s315 = sld [smem:[#allocation7 + %s25]]
      %s316 = sld [smem:[#allocation7 + %s25]]
      %p317 = scmp.lt.s32.totalorder %s23, 1
      %s318 = scalar_select %p317, %s23, 1
      %p319 = scmp.lt.s32.totalorder %s24, 3
      %s320 = scalar_select %p319, %s24, 3
      %p321 = scmp.lt.s32.totalorder %s316, 0
      %s322 = scalar_select %p321, %s316, 0
      %s323 = sadd.s32 %s322, %s320
      %s324 = smul.addr %s318, 4
      %s325 = sadd.s32 %s323, %s324
      %s326 = smul.addr %s325, 4
      %s327 = scalar_lea.vmem %s4, %s326
      %s328 = sld [smem:[#allocation7 + %s25]]
      %s329 = sld [smem:[#allocation6 + %s25]]
      %p330 = scmp.lt.s32.totalorder %s23, 1
      %s331 = scalar_select %p330, %s23, 1
      %p332 = scmp.lt.s32.totalorder %s24, 3
      %s333 = scalar_select %p332, %s24, 3
      %p334 = scmp.lt.s32.totalorder %s329, 0
      %s335 = scalar_select %p334, %s329, 0
      %s336 = sadd.s32 %s335, %s333
      %s337 = smul.addr %s331, 4
      %s338 = sadd.s32 %s336, %s337
      %s339 = smul.addr %s338, 8
      %s340 = scalar_lea.vmem %s5, %s339
      %s341 = sld [smem:[#allocation6 + %s25]]
      %s343 = sld [smem:[#allocation6 + %s25]]
      %s344 = sld [smem:[#allocation7 + %s25]]
      %p345 = scmp.eq.s32.totalorder %s344, 0
      // Predicated region
      $region33: #{_lambda_.1} parent=31 // pred_check
        %p346 = pneg %p345
      $region34: #{_lambda_.1} parent=31 // pred_check_branch
        %348 = sbr.rel (%p346) target = $region36
      $region35: #{_lambda_.1} parent=31 // pred_region
        %vm349 = vcmask 7168
        %350 = vst.msk [vmem:[#allocation2] sm:$0xff] %vm349, -1e+30
        %351 = vst.msk [vmem:[#allocation3] sm:$0xff] %vm349, 0.0
        %vm352 = vcmask 64512
        %353 = vst.msk [vmem:[#allocation4] sm:$0xff] %vm352, 0.0
      $region36: #{_lambda_.1} parent=31 // pred_fallthru
        _
      %v354 = vld [vmem:[%s301] sm:$0xf]
      %v355 = vld [vmem:[%s314] sm:$0xf]
      %v356 = vld [vmem:[%s327] sm:$0xf]
      %vm357 = vcmask 64512
      %v359 = vsel %vm357, %v354, 0
      %v362 = vsel %vm357, %v355, 0
      %364 = vmatpush.bf16.xpose.msra.mxu0 0
      %365 = vmatpush.bf16.xpose.msra.mxu0 0
      %366 = vmatpush.bf16.xpose.msra.mxu0 0
      %367 = vmatpush.bf16.xpose.msra.mxu0 0
      %368 = vmatpush.bf16.xpose.msra.mxu0 0
      %369 = vmatpush.bf16.xpose.msra.mxu0 0
      %370 = vmatpush.bf16.xpose.msra.mxu0 0
      %371 = vmatpush.bf16.xpose.msra.mxu0 %v362
      %372 = vmatmul.bf16.gmra.mxu0 %v359
      %v373 = vpop.f32.mrf.mxu0
      %v374 = vadd.f32 0.0, %v373
      %v375 = vpop.f32.mrf.mxu0
      %376 = vdwg.mxu0
      %p377 = scmp.lt.s32.totalorder %s344, %s343
      // Predicated region
      $region37: #{_lambda_.1} parent=31 // pred_check
        %p378 = pneg %p377
      $region38: #{_lambda_.1} parent=31 // pred_check_branch
        %380 = sbr.rel (%p378) target = $region40
      $region39: #{_lambda_.1} parent=31 // pred_region
        %v381 = vld [vmem:[#allocation2] sm:$0xff]
        %v382 = vsel %vm357, %v374, -inf
        %383 = vmax.xlane.f32.xlu0 %v382
        %v384 = vpop.xlane.xlu0 %383
        %v385 = vmax.f32 %v381, %v384
        %v386 = vsub.f32 %v381, %v385
        %v387 = vmul.f32 %v386, 1.442695
        %v388 = vpow.pop %v387
        %390 = vset.pattern.permute.xlu0 0
        %391 = vperm.xlu0 %390, %v385
        %v392 = vpop.permute.xlu0 %391
        %v394 = vsub.f32 %v374, %v392
        %v395 = vmul.f32 %v394, 1.442695
        %v396 = vpow.pop %v395
        %v397 = vld [vmem:[#allocation3] sm:$0xff]
        %v398 = vmul.f32 %v388, %v397
        %v399 = vsel %vm357, %v396, 0.0
        %400 = vadd.xlane.f32.xlu0 %v399
        %v401 = vpop.xlane.xlu0 %400
        %v402 = vadd.f32 %v398, %v401
        %vm403 = vcmask 7168
        %404 = vst.msk [vmem:[#allocation3] sm:$0xff] %vm403, %v402
        %v405 = vld [vmem:[#allocation4] sm:$0xff]
        %407 = vset.pattern.permute.xlu0 0
        %408 = vperm.xlu0 %407, %v388
        %v409 = vpop.permute.xlu0 %408
        %v411 = vmul.f32 %v409, %v405
        %v412 = vpack.c.bf16 %v396, %v396
        %v414 = vsel %vm357, %v412, 0
        %vm416 = vcmask 1043456
        %v418 = vsel %vm416, %v356, 0
        %420 = vmatpush.bf16.msra.mxu0 0
        %421 = vmatpush.bf16.msra.mxu0 0
        %422 = vmatpush.bf16.msra.mxu0 0
        %423 = vmatpush.bf16.msra.mxu0 0
        %424 = vmatpush.bf16.msra.mxu0 0
        %425 = vmatpush.bf16.msra.mxu0 0
        %426 = vmatpush.bf16.msra.mxu0 0
        %427 = vmatpush.bf16.msra.mxu0 %v418
        %428 = vmatmul.bf16.gmra.mxu0 %v414
        %v429 = vpop.f32.mrf.mxu0
        %v430 = vadd.f32 0.0, %v429
        %v431 = vpop.f32.mrf.mxu0
        %432 = vdwg.mxu0
        %v433 = vadd.f32 %v411, %v430
        %434 = vst.msk [vmem:[#allocation4] sm:$0xff] %vm357, %v433
        %435 = vst.msk [vmem:[#allocation2] sm:$0xff] %vm403, %v385
      $region40: #{_lambda_.1} parent=31 // pred_fallthru
        _
      %p436 = scmp.eq.s32.totalorder %s344, %s343
      // Predicated region
      $region41: #{_lambda_.1} parent=31 // pred_check
        %p437 = pneg %p436
      $region42: #{_lambda_.1} parent=31 // pred_check_branch
        %439 = sbr.rel (%p437) target = $region44
      $region43: #{_lambda_.1} parent=31 // pred_region
        %v440 = vlaneseq
        %v441 = vshrl.u32 %v440, 7
        %v442 = vlaneseq
        %v443 = vand.u32 %v442, 127
        %vm444 = vcmp.le.s32.totalorder %v443, %v441
        %v445 = vsel %vm444, %v374, -1e+30
        %v446 = vld [vmem:[#allocation2] sm:$0xff]
        %v447 = vsel %vm357, %v445, -inf
        %448 = vmax.xlane.f32.xlu0 %v447
        %v449 = vpop.xlane.xlu0 %448
        %v450 = vmax.f32 %v446, %v449
        %v451 = vsub.f32 %v446, %v450
        %v452 = vmul.f32 %v451, 1.442695
        %v453 = vpow.pop %v452
        %455 = vset.pattern.permute.xlu0 0
        %456 = vperm.xlu0 %455, %v450
        %v457 = vpop.permute.xlu0 %456
        %v459 = vsub.f32 %v445, %v457
        %v460 = vmul.f32 %v459, 1.442695
        %v461 = vpow.pop %v460
        %v462 = vld [vmem:[#allocation3] sm:$0xff]
        %v463 = vmul.f32 %v453, %v462
        %v464 = vsel %vm357, %v461, 0.0
        %465 = vadd.xlane.f32.xlu0 %v464
        %v466 = vpop.xlane.xlu0 %465
        %v467 = vadd.f32 %v463, %v466
        %vm468 = vcmask 7168
        %469 = vst.msk [vmem:[#allocation3] sm:$0xff] %vm468, %v467
        %v470 = vld [vmem:[#allocation4] sm:$0xff]
        %472 = vset.pattern.permute.xlu0 0
        %473 = vperm.xlu0 %472, %v453
        %v474 = vpop.permute.xlu0 %473
        %v476 = vmul.f32 %v474, %v470
        %v477 = vpack.c.bf16 %v461, %v461
        %v479 = vsel %vm357, %v477, 0
        %vm481 = vcmask 1043456
        %v483 = vsel %vm481, %v356, 0
        %485 = vmatpush.bf16.msra.mxu0 0
        %486 = vmatpush.bf16.msra.mxu0 0
        %487 = vmatpush.bf16.msra.mxu0 0
        %488 = vmatpush.bf16.msra.mxu0 0
        %489 = vmatpush.bf16.msra.mxu0 0
        %490 = vmatpush.bf16.msra.mxu0 0
        %491 = vmatpush.bf16.msra.mxu0 0
        %492 = vmatpush.bf16.msra.mxu0 %v483
        %493 = vmatmul.bf16.gmra.mxu0 %v479
        %v494 = vpop.f32.mrf.mxu0
        %v495 = vadd.f32 0.0, %v494
        %v496 = vpop.f32.mrf.mxu0
        %497 = vdwg.mxu0
        %v498 = vadd.f32 %v476, %v495
        %499 = vst.msk [vmem:[#allocation4] sm:$0xff] %vm357, %v498
        %500 = vst.msk [vmem:[#allocation2] sm:$0xff] %vm468, %v450
        %v501 = vld [vmem:[#allocation4] sm:$0xff]
        %v502 = vld [vmem:[#allocation3] sm:$0xff]
        %v503 = vrcp.pop %v502
        %505 = vset.pattern.permute.xlu0 0
        %506 = vperm.xlu0 %505, %v503
        %v507 = vpop.permute.xlu0 %506
        %v509 = vmul.f32 %v501, %v507
        %510 = vst.msk [vmem:[%s340] sm:$0xff] %vm357, %v509
      $region44: #{_lambda_.1} parent=31 // pred_fallthru
        _
      %s511 = sld [smem:[#allocation6 + %s25]]
      %p512 = scmp.lt.s32.totalorder %s23, 1
      %s513 = scalar_select %p512, %s23, 1
      %p514 = scmp.lt.s32.totalorder %s24, 3
      %s515 = scalar_select %p514, %s24, 3
      %p516 = scmp.lt.s32.totalorder %s511, 0
      %s517 = scalar_select %p516, %s511, 0
      %s518 = sadd.s32 %s517, %s515
      %s519 = smul.addr %s513, 4
      %s520 = sadd.s32 %s518, %s519
      %s521 = smul.addr %s520, 8
      %s522 = scalar_lea.vmem %s5, %s521
      // Predicated region
      $region45: #{_lambda_.1} parent=31 // pred_check
        %p523 = pneg %p157
      $region46: #{_lambda_.1} parent=31 // pred_check_branch
        %525 = sbr.rel (%p523) target = $region48
      $region47: #{_lambda_.1} parent=31 // pred_region
        %s526 = sld [smem:[#allocation6 + %s25]]
      $region48: #{_lambda_.1} parent=31 // pred_fallthru
        _
    $region32: #{_lambda_.1} parent=5 // pred_fallthru
      _
    %p527 = scmp.le.s32.totalorder 2, %s13
    // Predicated region
    $region49: #{_lambda_.1} parent=5 // pred_check
      %p528 = pneg %p527
    $region50: #{_lambda_.1} parent=5 // pred_check_branch
      %530 = sbr.rel (%p528) target = $region52
    $region51: #{_lambda_.1} parent=5 // pred_region
      %s531 = ssub.s32 %s13, 2
      // Predicated region
      $region53: #{_lambda_.1} parent=51 // pred_check
        %p532 = pneg %p163
      $region54: #{_lambda_.1} parent=51 // pred_check_branch
        %534 = sbr.rel (%p532) target = $region56
      $region55: #{_lambda_.1} parent=51 // pred_region
        %s535 = sld [smem:[#allocation6 + %s28]]
        %p536 = scmp.lt.s32.totalorder %s26, 1
        %s537 = scalar_select %p536, %s26, 1
        %p538 = scmp.lt.s32.totalorder %s27, 3
        %s539 = scalar_select %p538, %s27, 3
        %p540 = scmp.lt.s32.totalorder %s535, 0
        %s541 = scalar_select %p540, %s535, 0
        %s542 = sadd.s32 %s541, %s539
        %s543 = smul.addr %s537, 4
        %s544 = sadd.s32 %s542, %s543
        %s545 = smul.addr %s544, 8
        %s546 = scalar_lea.vmem %s5, %s545
      $region56: #{_lambda_.1} parent=51 // pred_fallthru
        _
    $region52: #{_lambda_.1} parent=5 // pred_fallthru
      _
  $region6: #{_lambda_.1} parent=0 // loop_footer
    %s17 = sadd.s32 1, %s13
  $region7: #{_lambda_.1} parent=0 // loop_footer_branch
    %12 = sbr.rel target = $region3
  $region8: #{_lambda_.1} parent=0 // loop_exit
    _

</llo_original>
